<compile_context>
chip_gen: v6e
topology: v6e:2x2x1
jax: 0.10.0
libtpu: 0.0.40
codegen_flags: <defaults>
</compile_context>

<pallas_src>
import functools

import jax
import jax.numpy as jnp
import numpy as np
from jax.experimental import pallas as pl
from jax.experimental.pallas import tpu as pltpu


def _softmax_last(a):
    # exp on EUP; normalization via EUP approx reciprocal (frees VALU slots);
    # denom >= 1 (max term contributes exp(0)=1) so approx=True is safe.
    m = jnp.max(a, axis=-1, keepdims=True)
    e = jnp.exp(a - m)
    denom = jnp.sum(e, axis=-1, keepdims=True)
    return e * pl.reciprocal(denom, approx=True)


def gsf_kernel(x_ref, w1_ref, b1_ref, w2_ref, b2_ref, dis_ref, o_ref, *,
               tau, v_threshold):
    # Blocks:
    #   x_ref : (b_blk, C_in,  T)   batch-leading slab, T lane-dense
    #   o_ref : (b_blk, C_out, T)
    #   weights / biases / dis softmax : full arrays, constant index_map
    w1 = w1_ref[...].astype(jnp.bfloat16)        # (C_out, C_in)  MXU operand
    w2 = w2_ref[...].astype(jnp.bfloat16)        # (C_out, C_out)
    b1 = b1_ref[...]                             # (C_out, 1) f32
    b2 = b2_ref[...]                             # (C_out, 1) f32
    dis_sm = dis_ref[...]                        # (T, T) f32, softmax(exp(-|i-j|/sigma))
    thresh = tau * v_threshold                   # LIF: x/tau >= v_th  <=>  x >= tau*v_th

    b_blk = x_ref.shape[0]

    def per_batch(b):
        x_b = x_ref[b].astype(jnp.bfloat16)                             # (C_in, T)

        # channel_reduce: 1x1 Conv1d == one MXU matmul (bf16 in, f32 acc)
        reduced = jnp.dot(w1, x_b,
                          preferred_element_type=jnp.float32) + b1      # (C_out, T) f32

        # F.normalize(p=2, dim=1): rsqrt on EUP (1e-24 == (1e-12)^2 clamp);
        # scale columns and cast straight to the bf16 MXU operand — no f32
        # norm_x slab is kept live.
        sumsq = jnp.sum(reduced * reduced, axis=0, keepdims=True)       # (1, T)
        inv = jax.lax.rsqrt(jnp.maximum(sumsq, 1e-24))
        norm16 = (reduced * inv).astype(jnp.bfloat16)                   # (C_out, T)

        # sim = norm_x^T @ norm_x — contract the channel (sublane) axis of
        # both operands on the MXU (transposed-operand path, no XLU transpose)
        sim = jax.lax.dot_general(norm16, norm16, (((0,), (0,)), ((), ())),
                                  preferred_element_type=jnp.float32)   # (T, T)
        adj = _softmax_last(sim) + dis_sm                               # (T, T)

        # gcn_conv (second 1x1 conv) + graph aggregation gcn @ adj
        r16 = reduced.astype(jnp.bfloat16)
        gcn = jnp.dot(w2, r16,
                      preferred_element_type=jnp.float32) + b2          # (C_out, T)
        gcn_out = jnp.dot(gcn.astype(jnp.bfloat16), adj.astype(jnp.bfloat16),
                          preferred_element_type=jnp.float32)           # (C_out, T)

        # LIF single step (v0 = v_reset = 0, decay_input=True): v = x / tau
        # spike = (v >= v_threshold); store directly into the output block.
        o_ref[b] = (gcn_out >= thresh).astype(jnp.float32)

    if b_blk == 1:
        per_batch(0)
    else:
        # loop (not a static Python for) bounds live ranges: only one (T,T)
        # sim/adj tile and one per-batch slab in flight.
        pl.loop(0, b_blk)(per_batch)


def global_spiking_feature(x, w1, b1, w2, b2, *, sigma=1.0, tau=10.0,
                           v_threshold=1.0, b_blk=1):
    """x: (T, B, C_in) float32.  Returns spikes (T, B, C_out) float32."""
    T, B, C_in = x.shape
    C_out = w1.shape[0]
    assert tau > 0.0, "threshold folding (x >= tau*v_th) assumes tau > 0"
    assert B % b_blk == 0, "b_blk must divide B"

    # Batch-leading layout: T stays lane-dense inside the kernel, per-batch
    # indexing is a leading-axis index (no mid-lane slices / masked copies),
    # and the grid has B // b_blk (>= 2 for B >= 2) steps so both v7x
    # TensorCores get work and the pipeline can overlap DMA with compute.
    x_bct = jnp.transpose(x, (1, 2, 0))                       # (B, C_in, T)
    b1c = b1.reshape(C_out, 1).astype(jnp.float32)
    b2c = b2.reshape(C_out, 1).astype(jnp.float32)

    # constant positional-decay softmax, computed once outside the kernel
    pos = jnp.arange(T, dtype=jnp.float32)
    dis = jnp.exp(-jnp.abs(pos[:, None] - pos[None, :]) / sigma)
    dis_sm = jax.nn.softmax(dis, axis=-1)                     # (T, T)

    kernel = functools.partial(gsf_kernel, tau=float(tau),
                               v_threshold=float(v_threshold))

    num_blocks = B // b_blk
    out_bct = pl.pallas_call(
        kernel,
        out_shape=jax.ShapeDtypeStruct((B, C_out, T), jnp.float32),
        grid_spec=pltpu.PrefetchScalarGridSpec(
            num_scalar_prefetch=0,
            grid=(num_blocks,),
            in_specs=[
                pl.BlockSpec((b_blk, C_in, T), lambda i: (i, 0, 0)),
                pl.BlockSpec((C_out, C_in), lambda i: (0, 0)),
                pl.BlockSpec((C_out, 1), lambda i: (0, 0)),
                pl.BlockSpec((C_out, C_out), lambda i: (0, 0)),
                pl.BlockSpec((C_out, 1), lambda i: (0, 0)),
                pl.BlockSpec((T, T), lambda i: (0, 0)),
            ],
            out_specs=pl.BlockSpec((b_blk, C_out, T), lambda i: (i, 0, 0)),
        ),
        compiler_params=pltpu.CompilerParams(
            dimension_semantics=("parallel",)),
    )(x_bct, w1, b1c, w2, b2c, dis_sm)

    # (B, C_out, T) -> (T, B, C_out)  == gcn_out.permute(2, 0, 1)
    return jnp.transpose(out_bct, (2, 0, 1))


def reference(x, w1, b1, w2, b2, *, sigma=1.0, tau=10.0, v_threshold=1.0):
    """Pure-JAX f32 reference mirroring the PyTorch forward.

    Returns (spikes, membrane_potential_v) so the test can ignore decisions
    that sit exactly on the threshold boundary.
    """
    xb = jnp.transpose(x, (1, 2, 0))                              # (B, C_in, T)
    reduced = jnp.einsum("oi,bit->bot", w1, xb) + b1[None, :, None]
    norm = jnp.maximum(jnp.linalg.norm(reduced, axis=1, keepdims=True), 1e-12)
    norm_x = reduced / norm
    sim = jnp.einsum("bct,bcs->bts", norm_x, norm_x)
    T = x.shape[0]
    pos = jnp.arange(T, dtype=jnp.float32)
    dis = jnp.exp(-jnp.abs(pos[:, None] - pos[None, :]) / sigma)
    adj = jax.nn.softmax(sim, axis=-1) + jax.nn.softmax(dis, axis=-1)[None]
    gcn = jnp.einsum("oi,bit->bot", w2, reduced) + b2[None, :, None]
    gcn_out = jnp.einsum("bct,bts->bcs", gcn, adj)
    v = jnp.transpose(gcn_out, (2, 0, 1)) / tau
    return (v >= v_threshold).astype(jnp.float32), v


if __name__ == "__main__":
    # small shapes: seq T=16, batch B=2, in_channels=32, out_channels=16
    T, B, C_in, C_out = 16, 2, 32, 16

    key = jax.random.PRNGKey(0)
    kx, k1, k2, k3, k4 = jax.random.split(key, 5)

    # input scaled up so some neurons actually spike (v >= 1 after /tau)
    x = jax.random.normal(kx, (T, B, C_in), dtype=jnp.float32) * 10.0

    # deterministic Conv1d-style init: U(-1/sqrt(fan_in), 1/sqrt(fan_in))
    bnd1 = 1.0 / np.sqrt(C_in)
    bnd2 = 1.0 / np.sqrt(C_out)
    w1 = jax.random.uniform(k1, (C_out, C_in), jnp.float32, -bnd1, bnd1)
    b1 = jax.random.uniform(k2, (C_out,), jnp.float32, -bnd1, bnd1)
    w2 = jax.random.uniform(k3, (C_out, C_out), jnp.float32, -bnd2, bnd2)
    b2 = jax.random.uniform(k4, (C_out,), jnp.float32, -bnd2, bnd2)

    out = jax.block_until_ready(global_spiking_feature(x, w1, b1, w2, b2))
    ref_spk, ref_v = reference(x, w1, b1, w2, b2)
    ref_spk = jax.block_until_ready(ref_spk)

    assert out.shape == (T, B, C_out) and out.dtype == jnp.float32

    # Spikes are binary.  bf16 MXU operands + EUP approx rsqrt/reciprocal can
    # only flip decisions whose membrane potential sits essentially on the
    # threshold, so: exact agreement required away from a narrow boundary band.
    boundary = jnp.abs(ref_v - 1.0) < 5e-2
    hard_mismatches = int(jnp.sum((out != ref_spk) & ~boundary))
    assert hard_mismatches == 0, (
        f"spike mismatches away from the threshold boundary: {hard_mismatches}")

    print("KERNEL_OK")
</pallas_src>

<mosaic_0001>
module attributes {stable_mosaic.version = 11 : i64} {
  func.func @gsf_kernel(%arg0: i32, %arg1: memref<1x32x16xf32, #tpu.memory_space<vmem>>, %arg2: memref<16x32xf32, #tpu.memory_space<vmem>>, %arg3: memref<16x1xf32, #tpu.memory_space<vmem>>, %arg4: memref<16x16xf32, #tpu.memory_space<vmem>>, %arg5: memref<16x1xf32, #tpu.memory_space<vmem>>, %arg6: memref<16x16xf32, #tpu.memory_space<vmem>>, %arg7: memref<1x16x16xf32, #tpu.memory_space<vmem>>) attributes {dimension_semantics = [#tpu.dimension_semantics<parallel>], iteration_bounds = array<i64: 2>, scalar_prefetch = 0 : i64, scratch_operands = 0 : i64, tpu.core_type = #tpu.core_type<tc>, window_params = [{transform_indices = @transform_0, window_bounds = array<i64: 1, 32, 16>}, {pipeline_mode = #tpu.pipeline_mode<synchronous>, transform_indices = @transform_1, window_bounds = array<i64: 16, 32>}, {pipeline_mode = #tpu.pipeline_mode<synchronous>, transform_indices = @transform_2, window_bounds = array<i64: 16, 1>}, {pipeline_mode = #tpu.pipeline_mode<synchronous>, transform_indices = @transform_3, window_bounds = array<i64: 16, 16>}, {pipeline_mode = #tpu.pipeline_mode<synchronous>, transform_indices = @transform_4, window_bounds = array<i64: 16, 1>}, {pipeline_mode = #tpu.pipeline_mode<synchronous>, transform_indices = @transform_5, window_bounds = array<i64: 16, 16>}, {transform_indices = @transform_6, window_bounds = array<i64: 1, 16, 16>}]} {
    %c0 = arith.constant 0 : index
    %c0_0 = arith.constant 0 : index
    %0 = vector.load %arg2[%c0, %c0_0] : memref<16x32xf32, #tpu.memory_space<vmem>>, vector<16x32xf32>
    %1 = arith.truncf %0 : vector<16x32xf32> to vector<16x32xbf16>
    %c0_1 = arith.constant 0 : index
    %c0_2 = arith.constant 0 : index
    %2 = vector.load %arg4[%c0_1, %c0_2] : memref<16x16xf32, #tpu.memory_space<vmem>>, vector<16x16xf32>
    %3 = arith.truncf %2 : vector<16x16xf32> to vector<16x16xbf16>
    %c0_3 = arith.constant 0 : index
    %c0_4 = arith.constant 0 : index
    %4 = vector.load %arg3[%c0_3, %c0_4] : memref<16x1xf32, #tpu.memory_space<vmem>>, vector<16x1xf32>
    %c0_5 = arith.constant 0 : index
    %c0_6 = arith.constant 0 : index
    %5 = vector.load %arg5[%c0_5, %c0_6] : memref<16x1xf32, #tpu.memory_space<vmem>>, vector<16x1xf32>
    %c0_7 = arith.constant 0 : index
    %c0_8 = arith.constant 0 : index
    %6 = vector.load %arg6[%c0_7, %c0_8] : memref<16x16xf32, #tpu.memory_space<vmem>>, vector<16x16xf32>
    %c0_9 = arith.constant 0 : index
    %c0_10 = arith.constant 0 : index
    %c0_11 = arith.constant 0 : index
    %7 = vector.load %arg1[%c0_9, %c0_10, %c0_11] : memref<1x32x16xf32, #tpu.memory_space<vmem>>, vector<1x32x16xf32>
    %8 = vector.shape_cast %7 : vector<1x32x16xf32> to vector<32x16xf32>
    %9 = arith.truncf %8 : vector<32x16xf32> to vector<32x16xbf16>
    %cst = arith.constant dense<0.000000e+00> : vector<16x16xf32>
    %10 = tpu.matmul %1, %9, %cst {dimension_numbers = #tpu.dot_dimension_numbers<[1], [0], [0], [1], [0, 0, 1, 1], [], []>} : vector<16x32xbf16>, vector<32x16xbf16>, vector<16x16xf32> -> vector<16x16xf32>
    %11 = vector.broadcast %4 : vector<16x1xf32> to vector<16x16xf32>
    %12 = arith.addf %10, %11 : vector<16x16xf32>
    %13 = arith.mulf %12, %12 : vector<16x16xf32>
    %cst_12 = arith.constant dense<0.000000e+00> : vector<16xf32>
    %14 = vector.multi_reduction <add>, %13, %cst_12 [0] : vector<16x16xf32> to vector<16xf32>
    %15 = vector.shape_cast %14 : vector<16xf32> to vector<1x16xf32>
    %cst_13 = arith.constant 1.000000e-24 : f32
    %16 = vector.broadcast %cst_13 : f32 to vector<1x16xf32>
    %17 = arith.maximumf %15, %16 : vector<1x16xf32>
    %18 = math.rsqrt %17 : vector<1x16xf32>
    %19 = vector.broadcast %18 : vector<1x16xf32> to vector<16x16xf32>
    %20 = arith.mulf %12, %19 : vector<16x16xf32>
    %21 = arith.truncf %20 : vector<16x16xf32> to vector<16x16xbf16>
    %cst_14 = arith.constant dense<0.000000e+00> : vector<16x16xf32>
    %22 = tpu.matmul %21, %21, %cst_14 {dimension_numbers = #tpu.dot_dimension_numbers<[0], [0], [1], [1], [0, 1, 1, 1], [], []>} : vector<16x16xbf16>, vector<16x16xbf16>, vector<16x16xf32> -> vector<16x16xf32>
    %cst_15 = arith.constant dense<0xFF800000> : vector<16xf32>
    %23 = vector.multi_reduction <maximumf>, %22, %cst_15 [1] : vector<16x16xf32> to vector<16xf32>
    %24 = vector.shape_cast %23 : vector<16xf32> to vector<16x1xf32>
    %25 = vector.broadcast %24 : vector<16x1xf32> to vector<16x16xf32>
    %26 = arith.subf %22, %25 : vector<16x16xf32>
    %27 = math.exp %26 : vector<16x16xf32>
    %cst_16 = arith.constant dense<0.000000e+00> : vector<16xf32>
    %28 = vector.multi_reduction <add>, %27, %cst_16 [1] : vector<16x16xf32> to vector<16xf32>
    %29 = vector.shape_cast %28 : vector<16xf32> to vector<16x1xf32>
    %30 = tpu.reciprocal %29 {approx = true} : vector<16x1xf32> -> vector<16x1xf32>
    %31 = vector.broadcast %30 : vector<16x1xf32> to vector<16x16xf32>
    %32 = arith.mulf %27, %31 : vector<16x16xf32>
    %33 = arith.addf %32, %6 : vector<16x16xf32>
    %34 = arith.truncf %12 : vector<16x16xf32> to vector<16x16xbf16>
    %cst_17 = arith.constant dense<0.000000e+00> : vector<16x16xf32>
    %35 = tpu.matmul %3, %34, %cst_17 {dimension_numbers = #tpu.dot_dimension_numbers<[1], [0], [0], [1], [0, 0, 1, 1], [], []>} : vector<16x16xbf16>, vector<16x16xbf16>, vector<16x16xf32> -> vector<16x16xf32>
    %36 = vector.broadcast %5 : vector<16x1xf32> to vector<16x16xf32>
    %37 = arith.addf %35, %36 : vector<16x16xf32>
    %38 = arith.truncf %37 : vector<16x16xf32> to vector<16x16xbf16>
    %39 = arith.truncf %33 : vector<16x16xf32> to vector<16x16xbf16>
    %cst_18 = arith.constant dense<0.000000e+00> : vector<16x16xf32>
    %40 = tpu.matmul %38, %39, %cst_18 {dimension_numbers = #tpu.dot_dimension_numbers<[1], [0], [0], [1], [0, 0, 1, 1], [], []>} : vector<16x16xbf16>, vector<16x16xbf16>, vector<16x16xf32> -> vector<16x16xf32>
    %cst_19 = arith.constant 1.000000e+01 : f32
    %41 = vector.broadcast %cst_19 : f32 to vector<16x16xf32>
    %42 = arith.cmpf oge, %40, %41 : vector<16x16xf32>
    %43 = arith.extui %42 : vector<16x16xi1> to vector<16x16xi32>
    %44 = arith.sitofp %43 : vector<16x16xi32> to vector<16x16xf32>
    %c0_20 = arith.constant 0 : index
    %c0_21 = arith.constant 0 : index
    %c0_22 = arith.constant 0 : index
    %45 = vector.load %arg7[%c0_20, %c0_21, %c0_22] : memref<1x16x16xf32, #tpu.memory_space<vmem>>, vector<1x16x16xf32>
    %46 = vector.shape_cast %45 : vector<1x16x16xf32> to vector<16x16xf32>
    %47 = vector.shape_cast %44 : vector<16x16xf32> to vector<1x16x16xf32>
    tpu.vector_store %arg7[%c0_20, %c0_21, %c0_22], %47 {strides = array<i32>} : memref<1x16x16xf32, #tpu.memory_space<vmem>>, vector<1x16x16xf32>,
    return
  }
  func.func @transform_0(%arg0: i32) -> (i32, i32, i32) {
    %c0_i32 = arith.constant 0 : i32
    %c0_i32_0 = arith.constant 0 : i32
    %c0_i32_1 = arith.constant 0 : i32
    return %arg0, %c0_i32, %c0_i32_0 : i32, i32, i32
  }
  func.func @transform_1(%arg0: i32) -> (i32, i32) {
    %c0_i32 = arith.constant 0 : i32
    %c0_i32_0 = arith.constant 0 : i32
    %c0_i32_1 = arith.constant 0 : i32
    return %c0_i32, %c0_i32_0 : i32, i32
  }
  func.func @transform_2(%arg0: i32) -> (i32, i32) {
    %c0_i32 = arith.constant 0 : i32
    %c0_i32_0 = arith.constant 0 : i32
    %c0_i32_1 = arith.constant 0 : i32
    return %c0_i32, %c0_i32_0 : i32, i32
  }
  func.func @transform_3(%arg0: i32) -> (i32, i32) {
    %c0_i32 = arith.constant 0 : i32
    %c0_i32_0 = arith.constant 0 : i32
    %c0_i32_1 = arith.constant 0 : i32
    return %c0_i32, %c0_i32_0 : i32, i32
  }
  func.func @transform_4(%arg0: i32) -> (i32, i32) {
    %c0_i32 = arith.constant 0 : i32
    %c0_i32_0 = arith.constant 0 : i32
    %c0_i32_1 = arith.constant 0 : i32
    return %c0_i32, %c0_i32_0 : i32, i32
  }
  func.func @transform_5(%arg0: i32) -> (i32, i32) {
    %c0_i32 = arith.constant 0 : i32
    %c0_i32_0 = arith.constant 0 : i32
    %c0_i32_1 = arith.constant 0 : i32
    return %c0_i32, %c0_i32_0 : i32, i32
  }
  func.func @transform_6(%arg0: i32) -> (i32, i32, i32) {
    %c0_i32 = arith.constant 0 : i32
    %c0_i32_0 = arith.constant 0 : i32
    %c0_i32_1 = arith.constant 0 : i32
    return %arg0, %c0_i32, %c0_i32_0 : i32, i32, i32
  }
}

</mosaic_0001>

<llo_original>
// kernel: tpu_custom_call.1
$region0: #{tpu_custom_call.1}
  #allocation0 [shape = 'u32[]', space=smem, size = 0x4, offset = 0x4, fixed_abs, tag = 'smem constant byte address 0x4 - core index']
  #allocation1 [shape = 'u32[144,128]{1,0:T(1,128)}', space=vmem, size = 0x12000, scoped, tag = 'internal scratch']
  %s0 = inlined_call_operand.vmem [shape: f32[2,32,16], index: 0, kind: input, shape index: {}]
  %s1 = inlined_call_operand.vmem [shape: f32[16,32], index: 1, kind: input, shape index: {}]
  %s2 = inlined_call_operand.vmem [shape: f32[16,1], index: 2, kind: input, shape index: {}]
  %s3 = inlined_call_operand.vmem [shape: f32[16,16], index: 3, kind: input, shape index: {}]
  %s4 = inlined_call_operand.vmem [shape: f32[16,1], index: 4, kind: input, shape index: {}]
  %s5 = inlined_call_operand.vmem [shape: f32[16,16], index: 5, kind: input, shape index: {}]
  %s6 = inlined_call_operand.hbm [shape: f32[2,16,16], index: 6, kind: output, shape index: {}]
  %s7 = sld [smem:[#allocation0]]
  $region57: #{tpu_custom_call.1} parent=0
    _
  %s9 = ssub.s32 1, %s7
  %s10 = scalar_select 0, %s9, %s7
  $region1: #{tpu_custom_call.1} parent=0
    #allocation2 [shape = 'u8[16384]{0}', space=vmem, size = 0x4000, scoped, tag = 'output window, operand 0']
    #allocation3 [shape = 's32[2]{0}', space=sflag, size = 0x8, scoped, tag = 'scoped memory for tpu_custom_call.1']
    %11 = vsyncpa [#allocation3], 0
    %s12 = scalar_lea.sflag [#allocation3], 1
    %13 = vsyncpa %s12, 0
    loop: start=0, step=1, limit=4
    $region2: #{tpu_custom_call.1} parent=1 // loop_pre_header
      _
    $region3: #{tpu_custom_call.1} parent=1 // loop_header
      %s15 = sphi 0, %s19
      %p16 = scmp.ge.s32.totalorder %s15, 4
      %s25 = sphi 0, %s27
      %s28 = sphi 0, %s25
      %s29 = sphi 0, %s28
      %s45 = sphi 0, %s29
      %s49 = sphi 0, %s49
      %s51 = sphi 0, %s49
      %s52 = sphi 0, %s51
      %s66 = sphi 0, %s52
      %s70 = sphi 0, %s70
      %s72 = sphi 0, %s70
      %s73 = sphi 0, %s72
      %s87 = sphi 0, %s73
      %s91 = sphi 0, %s91
      %s93 = sphi 0, %s91
      %s94 = sphi 0, %s93
      %s108 = sphi 0, %s94
      %s112 = sphi 0, %s112
      %s114 = sphi 0, %s112
      %s115 = sphi 0, %s114
      %s129 = sphi 0, %s115
      %s133 = sphi 0, %s133
      %s135 = sphi 0, %s133
      %s136 = sphi 0, %s135
      %s150 = sphi 0, %s136
      %s156 = sphi 0, %s158
      %s159 = sphi 0, %s156
      %s160 = sphi 0, %s159
      %s176 = sphi 0, %s160
    $region4: #{tpu_custom_call.1} parent=1 // loop_header_branch
      %18 = sbr.rel (%p16) target = $region8
    $region5: #{tpu_custom_call.1} parent=1 // loop_body
      %s20 = ssub.s32 %s15, 1
      %s21 = ssub.s32 %s15, 2
      %s22 = sadd.s32 %s15, 1
      %s23 = ssub.s32 %s15, %s22
      %p24 = scmp.eq.s32.totalorder %s23, 0
      %s26 = sadd.s32 %s25, 1
      %s27 = scalar_select %p24, %s25, %s26
      %p30 = pneg %p24
      %p31 = scmp.eq.s32.totalorder %s15, 1
      %p32 = por %p30, %p31
      %p33 = scmp.ne.s32.totalorder %s25, %s28
      %p34 = scmp.eq.s32.totalorder %s15, 0
      %p35 = por %p33, %p34
      %p36 = scmp.ne.s32.totalorder %s25, %s28
      %p37 = scmp.eq.s32.totalorder %s20, 1
      %p38 = por %p36, %p37
      %p39 = scmp.ne.s32.totalorder %s28, %s29
      %p40 = scmp.eq.s32.totalorder %s20, 0
      %p41 = por %p39, %p40
      %p42 = scmp.ne.s32.totalorder %s28, %s29
      %p43 = scmp.eq.s32.totalorder %s21, 1
      %p44 = por %p42, %p43
      %p46 = scmp.ne.s32.totalorder %s29, %s45
      %p47 = scmp.eq.s32.totalorder %s21, 0
      %p48 = por %p46, %p47
      %s50 = sadd.s32 %s49, 1
      %p53 = scmp.eq.s32.totalorder %s15, 1
      %p54 = scmp.ne.s32.totalorder %s49, %s51
      %p55 = scmp.eq.s32.totalorder %s15, 0
      %p56 = por %p54, %p55
      %p57 = scmp.ne.s32.totalorder %s49, %s51
      %p58 = scmp.eq.s32.totalorder %s20, 1
      %p59 = por %p57, %p58
      %p60 = scmp.ne.s32.totalorder %s51, %s52
      %p61 = scmp.eq.s32.totalorder %s20, 0
      %p62 = por %p60, %p61
      %p63 = scmp.ne.s32.totalorder %s51, %s52
      %p64 = scmp.eq.s32.totalorder %s21, 1
      %p65 = por %p63, %p64
      %p67 = scmp.ne.s32.totalorder %s52, %s66
      %p68 = scmp.eq.s32.totalorder %s21, 0
      %p69 = por %p67, %p68
      %s71 = sadd.s32 %s70, 1
      %p74 = scmp.eq.s32.totalorder %s15, 1
      %p75 = scmp.ne.s32.totalorder %s70, %s72
      %p76 = scmp.eq.s32.totalorder %s15, 0
      %p77 = por %p75, %p76
      %p78 = scmp.ne.s32.totalorder %s70, %s72
      %p79 = scmp.eq.s32.totalorder %s20, 1
      %p80 = por %p78, %p79
      %p81 = scmp.ne.s32.totalorder %s72, %s73
      %p82 = scmp.eq.s32.totalorder %s20, 0
      %p83 = por %p81, %p82
      %p84 = scmp.ne.s32.totalorder %s72, %s73
      %p85 = scmp.eq.s32.totalorder %s21, 1
      %p86 = por %p84, %p85
      %p88 = scmp.ne.s32.totalorder %s73, %s87
      %p89 = scmp.eq.s32.totalorder %s21, 0
      %p90 = por %p88, %p89
      %s92 = sadd.s32 %s91, 1
      %p95 = scmp.eq.s32.totalorder %s15, 1
      %p96 = scmp.ne.s32.totalorder %s91, %s93
      %p97 = scmp.eq.s32.totalorder %s15, 0
      %p98 = por %p96, %p97
      %p99 = scmp.ne.s32.totalorder %s91, %s93
      %p100 = scmp.eq.s32.totalorder %s20, 1
      %p101 = por %p99, %p100
      %p102 = scmp.ne.s32.totalorder %s93, %s94
      %p103 = scmp.eq.s32.totalorder %s20, 0
      %p104 = por %p102, %p103
      %p105 = scmp.ne.s32.totalorder %s93, %s94
      %p106 = scmp.eq.s32.totalorder %s21, 1
      %p107 = por %p105, %p106
      %p109 = scmp.ne.s32.totalorder %s94, %s108
      %p110 = scmp.eq.s32.totalorder %s21, 0
      %p111 = por %p109, %p110
      %s113 = sadd.s32 %s112, 1
      %p116 = scmp.eq.s32.totalorder %s15, 1
      %p117 = scmp.ne.s32.totalorder %s112, %s114
      %p118 = scmp.eq.s32.totalorder %s15, 0
      %p119 = por %p117, %p118
      %p120 = scmp.ne.s32.totalorder %s112, %s114
      %p121 = scmp.eq.s32.totalorder %s20, 1
      %p122 = por %p120, %p121
      %p123 = scmp.ne.s32.totalorder %s114, %s115
      %p124 = scmp.eq.s32.totalorder %s20, 0
      %p125 = por %p123, %p124
      %p126 = scmp.ne.s32.totalorder %s114, %s115
      %p127 = scmp.eq.s32.totalorder %s21, 1
      %p128 = por %p126, %p127
      %p130 = scmp.ne.s32.totalorder %s115, %s129
      %p131 = scmp.eq.s32.totalorder %s21, 0
      %p132 = por %p130, %p131
      %s134 = sadd.s32 %s133, 1
      %p137 = scmp.eq.s32.totalorder %s15, 1
      %p138 = scmp.ne.s32.totalorder %s133, %s135
      %p139 = scmp.eq.s32.totalorder %s15, 0
      %p140 = por %p138, %p139
      %p141 = scmp.ne.s32.totalorder %s133, %s135
      %p142 = scmp.eq.s32.totalorder %s20, 1
      %p143 = por %p141, %p142
      %p144 = scmp.ne.s32.totalorder %s135, %s136
      %p145 = scmp.eq.s32.totalorder %s20, 0
      %p146 = por %p144, %p145
      %p147 = scmp.ne.s32.totalorder %s135, %s136
      %p148 = scmp.eq.s32.totalorder %s21, 1
      %p149 = por %p147, %p148
      %p151 = scmp.ne.s32.totalorder %s136, %s150
      %p152 = scmp.eq.s32.totalorder %s21, 0
      %p153 = por %p151, %p152
      %s154 = ssub.s32 %s15, %s22
      %p155 = scmp.eq.s32.totalorder %s154, 0
      %s157 = sadd.s32 %s156, 1
      %s158 = scalar_select %p155, %s156, %s157
      %p161 = pneg %p155
      %p162 = scmp.eq.s32.totalorder %s15, 1
      %p163 = por %p161, %p162
      %p164 = scmp.ne.s32.totalorder %s156, %s159
      %p165 = scmp.eq.s32.totalorder %s15, 0
      %p166 = por %p164, %p165
      %p167 = scmp.ne.s32.totalorder %s156, %s159
      %p168 = scmp.eq.s32.totalorder %s20, 1
      %p169 = por %p167, %p168
      %p170 = scmp.ne.s32.totalorder %s159, %s160
      %p171 = scmp.eq.s32.totalorder %s20, 0
      %p172 = por %p170, %p171
      %p173 = scmp.ne.s32.totalorder %s159, %s160
      %p174 = scmp.eq.s32.totalorder %s21, 1
      %p175 = por %p173, %p174
      %p177 = scmp.ne.s32.totalorder %s160, %s176
      %p178 = scmp.eq.s32.totalorder %s21, 0
      %p179 = por %p177, %p178
      %p180 = scmp.le.s32.totalorder 1, %s15
      %p181 = scmp.lt.s32.totalorder %s15, 3
      %p182 = pnand %p180, %p181
      %p183 = pneg %p182
      // Predicated region
      $region9: #{tpu_custom_call.1} parent=5 // pred_check
        _
      $region10: #{tpu_custom_call.1} parent=5 // pred_check_branch
        %185 = sbr.rel (%p182) target = $region12
      $region11: #{tpu_custom_call.1} parent=5 // pred_region
        %s186 = ssub.s32 %s15, 1
        // Predicated region
        $region13: #{tpu_custom_call.1} parent=11 // pred_check
          %p187 = pneg %p62
        $region14: #{tpu_custom_call.1} parent=11 // pred_check_branch
          %189 = sbr.rel (%p187) target = $region16
        $region15: #{tpu_custom_call.1} parent=11 // pred_region
          _
        $region16: #{tpu_custom_call.1} parent=11 // pred_fallthru
          _
        // Predicated region
        $region17: #{tpu_custom_call.1} parent=11 // pred_check
          %p190 = pneg %p83
        $region18: #{tpu_custom_call.1} parent=11 // pred_check_branch
          %192 = sbr.rel (%p190) target = $region20
        $region19: #{tpu_custom_call.1} parent=11 // pred_region
          _
        $region20: #{tpu_custom_call.1} parent=11 // pred_fallthru
          _
        // Predicated region
        $region21: #{tpu_custom_call.1} parent=11 // pred_check
          %p193 = pneg %p104
        $region22: #{tpu_custom_call.1} parent=11 // pred_check_branch
          %195 = sbr.rel (%p193) target = $region24
        $region23: #{tpu_custom_call.1} parent=11 // pred_region
          _
        $region24: #{tpu_custom_call.1} parent=11 // pred_fallthru
          _
        // Predicated region
        $region25: #{tpu_custom_call.1} parent=11 // pred_check
          %p196 = pneg %p125
        $region26: #{tpu_custom_call.1} parent=11 // pred_check_branch
          %198 = sbr.rel (%p196) target = $region28
        $region27: #{tpu_custom_call.1} parent=11 // pred_region
          _
        $region28: #{tpu_custom_call.1} parent=11 // pred_fallthru
          _
        // Predicated region
        $region29: #{tpu_custom_call.1} parent=11 // pred_check
          %p199 = pneg %p146
        $region30: #{tpu_custom_call.1} parent=11 // pred_check_branch
          %201 = sbr.rel (%p199) target = $region32
        $region31: #{tpu_custom_call.1} parent=11 // pred_region
          _
        $region32: #{tpu_custom_call.1} parent=11 // pred_fallthru
          _
      $region12: #{tpu_custom_call.1} parent=5 // pred_fallthru
        _
      %p202 = scmp.lt.s32.totalorder %s15, 2
      // Predicated region
      $region33: #{tpu_custom_call.1} parent=5 // pred_check
        %p203 = pneg %p202
      $region34: #{tpu_custom_call.1} parent=5 // pred_check_branch
        %205 = sbr.rel (%p203) target = $region36
      $region35: #{tpu_custom_call.1} parent=5 // pred_region
        // Predicated region
        $region37: #{tpu_custom_call.1} parent=35 // pred_check
          %p206 = pneg %p35
        $region38: #{tpu_custom_call.1} parent=35 // pred_check_branch
          %208 = sbr.rel (%p206) target = $region40
        $region39: #{tpu_custom_call.1} parent=35 // pred_region
          %p209 = scmp.lt.s32.totalorder %s15, 1
          %s210 = scalar_select %p209, %s15, 1
          %s211 = smul.addr %s210, 4
          %s212 = smul.addr %s211, 8
          %s213 = scalar_lea.vmem %s0, %s212
        $region40: #{tpu_custom_call.1} parent=35 // pred_fallthru
          _
      $region36: #{tpu_custom_call.1} parent=5 // pred_fallthru
        _
      %p214 = scmp.le.s32.totalorder 1, %s15
      %p215 = scmp.lt.s32.totalorder %s15, 3
      %p216 = pnand %p214, %p215
      %p217 = pneg %p216
      // Predicated region
      $region41: #{tpu_custom_call.1} parent=5 // pred_check
        _
      $region42: #{tpu_custom_call.1} parent=5 // pred_check_branch
        %219 = sbr.rel (%p216) target = $region44
      $region43: #{tpu_custom_call.1} parent=5 // pred_region
        %s220 = ssub.s32 %s15, 1
        %p221 = scmp.lt.s32.totalorder %s20, 1
        %s222 = scalar_select %p221, %s20, 1
        %s223 = smul.addr %s222, 4
        %s224 = smul.addr %s223, 8
        %s225 = scalar_lea.vmem %s0, %s224
        %p226 = pneg %p41
        %p227 = pneg %p38
        %p228 = pneg %p62
        %p229 = pneg %p59
        %p230 = pneg %p83
        %p231 = pneg %p80
        %p232 = pneg %p104
        %p233 = pneg %p101
        %p234 = pneg %p125
        %p235 = pneg %p122
        %p236 = pneg %p146
        %p237 = pneg %p143
        %p238 = pneg %p172
        %p239 = pneg %p169
        %s240 = sand.u32 %s159, 1
        %s241 = scalar_lea.sflag [#allocation3], %s240
        %s242 = sand.u32 %s159, 1
        %s243 = smul.addr %s242, 16
        %s244 = scalar_lea.vmem [#allocation2], %s243
        %p245 = scmp.lt.s32.totalorder %s20, 1
        %s246 = scalar_select %p245, %s20, 1
        %s247 = smul.addr %s246, 4
        %s248 = smul.addr %s247, 8
        %s249 = scalar_lea.vmem %s0, %s248
        %v251 = vld [vmem:[%s1] sm:$0xff]
        %v252 = vld [vmem:[%s1 + $0x8] sm:$0xff]
        %v253 = vpack.c.bf16 %v252, %v251
        %v254 = vld [vmem:[%s3] sm:$0xff]
        %v255 = vld [vmem:[%s3 + $0x8] sm:$0xff]
        %v256 = vpack.c.bf16 %v255, %v254
        %v257 = vld [vmem:[%s2] sm:$0xff]
        %v258 = vld [vmem:[%s2 + $0x8] sm:$0xff]
        %v259 = vld [vmem:[%s4] sm:$0xff]
        %v260 = vld [vmem:[%s4 + $0x8] sm:$0xff]
        %v261 = vld [vmem:[%s5] sm:$0xff]
        %v262 = vld [vmem:[%s5 + $0x8] sm:$0xff]
        %v263 = vld [vmem:[%s249] sm:$0xff]
        %v264 = vld [vmem:[%s249 + $0x8] sm:$0xff]
        %v265 = vld [vmem:[%s249 + $0x10] sm:$0xff]
        %v266 = vld [vmem:[%s249 + $0x18] sm:$0xff]
        %v267 = vpack.c.bf16 %v264, %v263
        %v268 = vpack.c.bf16 %v266, %v265
        %270 = vset.pattern.permute.xlu0 0
        %271 = vperm.xlu0 %270, %v257
        %v272 = vpop.permute.xlu0 %271
        %275 = vset.pattern.permute.xlu0 0
        %276 = vperm.xlu0 %275, %v258
        %v277 = vpop.permute.xlu0 %276
        %vm279 = vcmask 261120
        %v281 = vsel %vm279, %v253, 0
        %283 = vmatprep.subr.bf16.mxu0 0
        %284 = vmatpush1.bf16.msra.mxu0 0
        %285 = vmatprep.subr.bf16.mxu0 0
        %286 = vmatpush1.bf16.msra.mxu0 0
        %287 = vmatprep.subr.bf16.mxu0 0
        %288 = vmatpush1.bf16.msra.mxu0 0
        %289 = vmatprep.subr.bf16.mxu0 0
        %290 = vmatpush1.bf16.msra.mxu0 0
        %291 = vmatprep.subr.bf16.mxu0 0
        %292 = vmatpush1.bf16.msra.mxu0 0
        %293 = vmatprep.subr.bf16.mxu0 0
        %294 = vmatpush1.bf16.msra.mxu0 0
        %295 = vmatprep.subr.bf16.mxu0 0
        %296 = vmatpush1.bf16.msra.mxu0 %v268
        %297 = vmatprep.subr.bf16.mxu0 0
        %298 = vmatpush1.bf16.msra.mxu0 %v267
        %299 = vmatprep.subr.bf16.mxu0 0
        %300 = vmatpush2.bf16.msra.mxu0 0
        %301 = vmatprep.subr.bf16.mxu0 0
        %302 = vmatpush2.bf16.msra.mxu0 0
        %303 = vmatprep.subr.bf16.mxu0 0
        %304 = vmatpush2.bf16.msra.mxu0 0
        %305 = vmatprep.subr.bf16.mxu0 0
        %306 = vmatpush2.bf16.msra.mxu0 0
        %307 = vmatprep.subr.bf16.mxu0 0
        %308 = vmatpush2.bf16.msra.mxu0 0
        %309 = vmatprep.subr.bf16.mxu0 0
        %310 = vmatpush2.bf16.msra.mxu0 0
        %311 = vmatprep.subr.bf16.mxu0 0
        %312 = vmatpush2.bf16.msra.mxu0 0
        %313 = vmatprep.subr.bf16.mxu0 0
        %314 = vmatpush2.bf16.msra.mxu0 0
        %315 = vmatprep.mubr.bf16.mxu0 0
        %316 = vmatmul.mubr.bf16.gmra.mxu0 %v281
        %v317 = vpop.f32.mrf.mxu0
        %v318 = vadd.f32 %v272, %v317
        %v319 = vpop.f32.mrf.mxu0
        %v320 = vpop.f32.mrf.mxu0
        %v321 = vadd.f32 %v277, %v320
        %v322 = vpop.f32.mrf.mxu0
        %323 = vdwg.mxu0
        %v324 = vmul.f32 %v318, %v318
        %v325 = vmul.f32 %v321, %v321
        %vm326 = vcmask 130048
        %v327 = vsel %vm326, %v324, 0.0
        %v328 = vsel %vm326, %v325, 0.0
        %v329 = vadd.f32 %v327, %v328
        %v330 = vrot.slane %v329, 4
        %v331 = vadd.f32 %v329, %v330
        %v332 = vrot.slane %v331, 2
        %v333 = vadd.f32 %v331, %v332
        %v334 = vrot.slane %v333, 1
        %v335 = vadd.f32 %v333, %v334
        %v336 = vmax.f32 %v335, 1e-24
        %v337 = vrsqrt.pop %v336
        %v338 = vmul.f32 %v318, %v337
        %v339 = vmul.f32 %v321, %v337
        %v340 = vpack.c.bf16 %v339, %v338
        %341 = vxpose.xlu0.c.b16.start [1/8] %v340, 128
        %342 = vxpose.xlu0.c.b16.cont [2/8] 0, 128
        %343 = vxpose.xlu0.c.b16.cont [3/8] 0, 128
        %344 = vxpose.xlu0.c.b16.cont [4/8] 0, 128
        %345 = vxpose.xlu0.c.b16.cont [5/8] 0, 128
        %346 = vxpose.xlu0.c.b16.cont [6/8] 0, 128
        %347 = vxpose.xlu0.c.b16.cont [7/8] 0, 128
        %348 = vxpose.xlu0.c.b16.end [8/8] 0, 128
        %v349 = vpop.trf.xlu0
        %v350 = vpop.trf.xlu0
        %v351 = vpop.trf.xlu0
        %v352 = vpop.trf.xlu0
        %v353 = vpop.trf.xlu0
        %v354 = vpop.trf.xlu0
        %v355 = vpop.trf.xlu0
        %v356 = vpop.trf.xlu0
        %v358 = vsel %vm326, %v349, 0
        %360 = vmatprep.subr.bf16.mxu0 0
        %361 = vmatpush1.bf16.msra.mxu0 0
        %362 = vmatprep.subr.bf16.mxu0 0
        %363 = vmatpush1.bf16.msra.mxu0 0
        %364 = vmatprep.subr.bf16.mxu0 0
        %365 = vmatpush1.bf16.msra.mxu0 0
        %366 = vmatprep.subr.bf16.mxu0 0
        %367 = vmatpush1.bf16.msra.mxu0 0
        %368 = vmatprep.subr.bf16.mxu0 0
        %369 = vmatpush1.bf16.msra.mxu0 0
        %370 = vmatprep.subr.bf16.mxu0 0
        %371 = vmatpush1.bf16.msra.mxu0 0
        %372 = vmatprep.subr.bf16.mxu0 0
        %373 = vmatpush1.bf16.msra.mxu0 0
        %374 = vmatprep.subr.bf16.mxu0 0
        %375 = vmatpush1.bf16.msra.mxu0 %v340
        %376 = vmatprep.subr.bf16.mxu0 0
        %377 = vmatpush2.bf16.msra.mxu0 0
        %378 = vmatprep.subr.bf16.mxu0 0
        %379 = vmatpush2.bf16.msra.mxu0 0
        %380 = vmatprep.subr.bf16.mxu0 0
        %381 = vmatpush2.bf16.msra.mxu0 0
        %382 = vmatprep.subr.bf16.mxu0 0
        %383 = vmatpush2.bf16.msra.mxu0 0
        %384 = vmatprep.subr.bf16.mxu0 0
        %385 = vmatpush2.bf16.msra.mxu0 0
        %386 = vmatprep.subr.bf16.mxu0 0
        %387 = vmatpush2.bf16.msra.mxu0 0
        %388 = vmatprep.subr.bf16.mxu0 0
        %389 = vmatpush2.bf16.msra.mxu0 0
        %390 = vmatprep.subr.bf16.mxu0 0
        %391 = vmatpush2.bf16.msra.mxu0 0
        %392 = vmatprep.mubr.bf16.mxu0 0
        %393 = vmatmul.mubr.bf16.gmra.mxu0 %v358
        %v394 = vpop.f32.mrf.mxu0
        %v395 = vadd.f32 0.0, %v394
        %v396 = vpop.f32.mrf.mxu0
        %v397 = vpop.f32.mrf.mxu0
        %v398 = vadd.f32 0.0, %v397
        %v399 = vpop.f32.mrf.mxu0
        %400 = vdwg.mxu0
        %v401 = vsel %vm326, %v395, -inf
        %402 = vmax.xlane.f32.xlu0 %v401
        %v403 = vpop.xlane.xlu0 %402
        %v404 = vsel %vm326, %v398, -inf
        %405 = vmax.xlane.f32.xlu0 %v404
        %v406 = vpop.xlane.xlu0 %405
        %v407 = vsub.f32 %v395, %v403
        %v408 = vsub.f32 %v398, %v406
        %v409 = vmul.f32 %v407, 1.442695
        %v410 = vpow.pop %v409
        %v411 = vmul.f32 %v408, 1.442695
        %v412 = vpow.pop %v411
        %v413 = vsel %vm326, %v410, 0.0
        %414 = vadd.xlane.f32.xlu0 %v413
        %v415 = vpop.xlane.xlu0 %414
        %v416 = vsel %vm326, %v412, 0.0
        %417 = vadd.xlane.f32.xlu0 %v416
        %v418 = vpop.xlane.xlu0 %417
        %v419 = vrcp.pop %v415
        %v420 = vrcp.pop %v418
        %v421 = vmul.f32 %v410, %v419
        %v422 = vmul.f32 %v412, %v420
        %v423 = vadd.f32 %v421, %v261
        %v424 = vadd.f32 %v422, %v262
        %v425 = vpack.c.bf16 %v321, %v318
        %427 = vset.pattern.permute.xlu0 0
        %428 = vperm.xlu0 %427, %v259
        %v429 = vpop.permute.xlu0 %428
        %432 = vset.pattern.permute.xlu0 0
        %433 = vperm.xlu0 %432, %v260
        %v434 = vpop.permute.xlu0 %433
        %v437 = vsel %vm326, %v256, 0
        %439 = vmatprep.subr.bf16.mxu0 0
        %440 = vmatpush1.bf16.msra.mxu0 0
        %441 = vmatprep.subr.bf16.mxu0 0
        %442 = vmatpush1.bf16.msra.mxu0 0
        %443 = vmatprep.subr.bf16.mxu0 0
        %444 = vmatpush1.bf16.msra.mxu0 0
        %445 = vmatprep.subr.bf16.mxu0 0
        %446 = vmatpush1.bf16.msra.mxu0 0
        %447 = vmatprep.subr.bf16.mxu0 0
        %448 = vmatpush1.bf16.msra.mxu0 0
        %449 = vmatprep.subr.bf16.mxu0 0
        %450 = vmatpush1.bf16.msra.mxu0 0
        %451 = vmatprep.subr.bf16.mxu0 0
        %452 = vmatpush1.bf16.msra.mxu0 0
        %453 = vmatprep.subr.bf16.mxu0 0
        %454 = vmatpush1.bf16.msra.mxu0 %v425
        %455 = vmatprep.subr.bf16.mxu0 0
        %456 = vmatpush2.bf16.msra.mxu0 0
        %457 = vmatprep.subr.bf16.mxu0 0
        %458 = vmatpush2.bf16.msra.mxu0 0
        %459 = vmatprep.subr.bf16.mxu0 0
        %460 = vmatpush2.bf16.msra.mxu0 0
        %461 = vmatprep.subr.bf16.mxu0 0
        %462 = vmatpush2.bf16.msra.mxu0 0
        %463 = vmatprep.subr.bf16.mxu0 0
        %464 = vmatpush2.bf16.msra.mxu0 0
        %465 = vmatprep.subr.bf16.mxu0 0
        %466 = vmatpush2.bf16.msra.mxu0 0
        %467 = vmatprep.subr.bf16.mxu0 0
        %468 = vmatpush2.bf16.msra.mxu0 0
        %469 = vmatprep.subr.bf16.mxu0 0
        %470 = vmatpush2.bf16.msra.mxu0 0
        %471 = vmatprep.mubr.bf16.mxu0 0
        %472 = vmatmul.mubr.bf16.gmra.mxu0 %v437
        %v473 = vpop.f32.mrf.mxu0
        %v474 = vadd.f32 %v429, %v473
        %v475 = vpop.f32.mrf.mxu0
        %v476 = vpop.f32.mrf.mxu0
        %v477 = vadd.f32 %v434, %v476
        %v478 = vpop.f32.mrf.mxu0
        %479 = vdwg.mxu0
        %v480 = vpack.c.bf16 %v477, %v474
        %v481 = vpack.c.bf16 %v424, %v423
        %v483 = vsel %vm326, %v480, 0
        %485 = vmatprep.subr.bf16.mxu0 0
        %486 = vmatpush1.bf16.msra.mxu0 0
        %487 = vmatprep.subr.bf16.mxu0 0
        %488 = vmatpush1.bf16.msra.mxu0 0
        %489 = vmatprep.subr.bf16.mxu0 0
        %490 = vmatpush1.bf16.msra.mxu0 0
        %491 = vmatprep.subr.bf16.mxu0 0
        %492 = vmatpush1.bf16.msra.mxu0 0
        %493 = vmatprep.subr.bf16.mxu0 0
        %494 = vmatpush1.bf16.msra.mxu0 0
        %495 = vmatprep.subr.bf16.mxu0 0
        %496 = vmatpush1.bf16.msra.mxu0 0
        %497 = vmatprep.subr.bf16.mxu0 0
        %498 = vmatpush1.bf16.msra.mxu0 0
        %499 = vmatprep.subr.bf16.mxu0 0
        %500 = vmatpush1.bf16.msra.mxu0 %v481
        %501 = vmatprep.subr.bf16.mxu0 0
        %502 = vmatpush2.bf16.msra.mxu0 0
        %503 = vmatprep.subr.bf16.mxu0 0
        %504 = vmatpush2.bf16.msra.mxu0 0
        %505 = vmatprep.subr.bf16.mxu0 0
        %506 = vmatpush2.bf16.msra.mxu0 0
        %507 = vmatprep.subr.bf16.mxu0 0
        %508 = vmatpush2.bf16.msra.mxu0 0
        %509 = vmatprep.subr.bf16.mxu0 0
        %510 = vmatpush2.bf16.msra.mxu0 0
        %511 = vmatprep.subr.bf16.mxu0 0
        %512 = vmatpush2.bf16.msra.mxu0 0
        %513 = vmatprep.subr.bf16.mxu0 0
        %514 = vmatpush2.bf16.msra.mxu0 0
        %515 = vmatprep.subr.bf16.mxu0 0
        %516 = vmatpush2.bf16.msra.mxu0 0
        %517 = vmatprep.mubr.bf16.mxu0 0
        %518 = vmatmul.mubr.bf16.gmra.mxu0 %v483
        %v519 = vpop.f32.mrf.mxu0
        %v520 = vadd.f32 0.0, %v519
        %v521 = vpop.f32.mrf.mxu0
        %v522 = vpop.f32.mrf.mxu0
        %v523 = vadd.f32 0.0, %v522
        %v524 = vpop.f32.mrf.mxu0
        %525 = vdwg.mxu0
        %vm526 = vcmp.ge.f32.partialorder %v520, 10.0
        %vm527 = vcmp.ge.f32.partialorder %v523, 10.0
        %v528 = vsel %vm526, 1, 0
        %v529 = vsel %vm527, 1, 0
        %v530 = vcvt.s32.f32 %v528
        %v531 = vcvt.s32.f32 %v529
        %532 = vst.msk [vmem:[%s244] sm:$0xff] %vm326, %v530
        %533 = vst.msk [vmem:[%s244 + $0x8] sm:$0xff] %vm326, %v531
        %s534 = sand.u32 %s159, 1
        %s535 = scalar_lea.sflag [#allocation3], %s534
        %s536 = sand.u32 %s159, 1
        %s537 = smul.addr %s536, 16
        %s538 = scalar_lea.vmem [#allocation2], %s537
        // Predicated region
        $region45: #{tpu_custom_call.1} parent=43 // pred_check
          %p539 = pneg %p169
        $region46: #{tpu_custom_call.1} parent=43 // pred_check_branch
          %541 = sbr.rel (%p539) target = $region48
        $region47: #{tpu_custom_call.1} parent=43 // pred_region
          %s543 = ssub.s32 256, 256
          %544 = vsyncadd %s535, %s543
          %s545 = smul.addr %s20, 2
          %s546 = smul.addr %s545, 128
          %s547 = scalar_lea.hbm %s6, %s546
          %s548 = sshll.u32 %s538, 4
          %s549 = int_to_ptr.vmem [resolvable:$true] %s548
          %554 = dma.vmem_to_hbm [thread:$0]  %s549, 256, %s547, %s535, 128, 128, 8
        $region48: #{tpu_custom_call.1} parent=43 // pred_fallthru
          _
      $region44: #{tpu_custom_call.1} parent=5 // pred_fallthru
        _
      %p555 = scmp.le.s32.totalorder 2, %s15
      // Predicated region
      $region49: #{tpu_custom_call.1} parent=5 // pred_check
        %p556 = pneg %p555
      $region50: #{tpu_custom_call.1} parent=5 // pred_check_branch
        %558 = sbr.rel (%p556) target = $region52
      $region51: #{tpu_custom_call.1} parent=5 // pred_region
        %s559 = ssub.s32 %s15, 2
        // Predicated region
        $region53: #{tpu_custom_call.1} parent=51 // pred_check
          %p560 = pneg %p175
        $region54: #{tpu_custom_call.1} parent=51 // pred_check_branch
          %562 = sbr.rel (%p560) target = $region56
        $region55: #{tpu_custom_call.1} parent=51 // pred_region
          %s563 = sand.u32 %s160, 1
          %s564 = scalar_lea.sflag [#allocation3], %s563
          %s565 = sand.u32 %s160, 1
          %s566 = smul.addr %s565, 16
          %s567 = scalar_lea.vmem [#allocation2], %s566
          %568 = dma.done %s564, 256
        $region56: #{tpu_custom_call.1} parent=51 // pred_fallthru
          _
      $region52: #{tpu_custom_call.1} parent=5 // pred_fallthru
        _
    $region6: #{tpu_custom_call.1} parent=1 // loop_footer
      %s19 = sadd.s32 1, %s15
    $region7: #{tpu_custom_call.1} parent=1 // loop_footer_branch
      %14 = sbr.rel target = $region3
    $region8: #{tpu_custom_call.1} parent=1 // loop_exit
      _
    %569 = vsyncpa [#allocation3], 1
    %s570 = scalar_lea.sflag [#allocation3], 1
    %571 = vsyncpa %s570, 1

</llo_original>
